<compile_context>
chip_gen: v5e
topology: v5e:2x2
jax: 0.10.0
libtpu: 0.0.40
codegen_flags: <defaults>
</compile_context>

<pallas_src>
import jax
import jax.numpy as jnp
from jax.experimental import pallas as pl
from jax.experimental.pallas import tpu as pltpu

H = W = 33
HW = H * W                     # 1089
HWP = 1152                     # 9 * 128 lane-padded flat spatial dim
HWP2 = 2 * HWP                 # merged (main | symmetry) width
TN = 384                       # grad-step column tile (3 * 128), grid=(3,)
C = 32                         # feature channels
K9 = 9 * C                     # im2col slab rows for 32-channel convs


# ---------------------------------------------------------------------------
# Lane-rotate helper (calibrated once, eagerly, so we get jnp.roll semantics).
# ---------------------------------------------------------------------------
_ROLL_SIGN = None


def _calibrate_roll_sign():
    """pltpu.roll lowers to the native XLU lane rotate; calibrate its sign
    convention against jnp.roll once with a tiny probe kernel.  Must be called
    eagerly (outside any jit trace) before the main kernels are traced."""
    global _ROLL_SIGN
    if _ROLL_SIGN is None:
        def probe(x_ref, o_ref):
            o_ref[...] = pltpu.roll(x_ref[...], 1, 1)

        x = jnp.tile(jnp.arange(128, dtype=jnp.float32)[None, :], (8, 1))
        out = pl.pallas_call(
            probe, out_shape=jax.ShapeDtypeStruct((8, 128), jnp.float32))(x)
        v = float(out[0, 0])
        if v == 127.0:          # pltpu.roll(x, 1) == jnp.roll(x, 1)
            _ROLL_SIGN = 1
        elif v == 1.0:          # opposite convention
            _ROLL_SIGN = -1
        else:
            raise RuntimeError(
                f"unexpected pltpu.roll convention (probe value {v})")
    return _ROLL_SIGN


def _lane_roll(x, shift):
    """jnp.roll(x, shift, axis=-1) semantics using the native lane rotate."""
    n = x.shape[-1]
    return pltpu.roll(x, (_calibrate_roll_sign() * shift) % n, x.ndim - 1)


# ---------------------------------------------------------------------------
# Kernel 1: proximal gradient step   o = x - lam * x @ PhiTPhi + lam * PhiTb
# ---------------------------------------------------------------------------
def _grad_step_kernel(lam_ref, x_ref, phi_ref, phitb_ref, o_ref):
    lam = lam_ref[0]
    j = pl.program_id(0)
    # bf16 MXU operands, f32 accumulation.  x stays resident across steps;
    # PhiTPhi is the only HBM-heavy stream.
    gram = jnp.dot(x_ref[...].astype(jnp.bfloat16), phi_ref[...],
                   preferred_element_type=jnp.float32)              # [B, TN]
    start = pl.multiple_of(j * TN, 128)                              # true: 384 % 128 == 0
    x_tile = x_ref[:, pl.ds(start, TN)]
    o_ref[...] = x_tile - lam * gram + lam * phitb_ref[...]


def _grad_step(x_pad, phi_bf16, phitb_pad, lam):
    b = x_pad.shape[0]
    return pl.pallas_call(
        _grad_step_kernel,
        grid=(HWP // TN,),                                           # 3 lane-aligned tiles
        out_shape=jax.ShapeDtypeStruct((b, HWP), jnp.float32),
        in_specs=[
            pl.BlockSpec(memory_space=pltpu.MemorySpace.SMEM),       # lambda_step
            pl.BlockSpec((b, HWP), lambda j: (0, 0)),                # x (resident)
            pl.BlockSpec((HWP, TN), lambda j: (0, j)),               # PhiTPhi col tile
            pl.BlockSpec((b, TN), lambda j: (0, j)),                 # PhiTb col tile
        ],
        out_specs=pl.BlockSpec((b, TN), lambda j: (0, j)),
        compiler_params=pltpu.CompilerParams(
            dimension_semantics=("parallel",)),
    )(lam, x_pad, phi_bf16, phitb_pad)


# ---------------------------------------------------------------------------
# Kernel 2: fused conv chain (per image), lane-dense [Cout, HWP] GEMMs with a
# shared bf16 im2col slab and merged backward (shared-weight) convs.
# ---------------------------------------------------------------------------
def _fused_block_kernel(thr_ref, x_ref, m_ref,
                        wd_ref, w1f_ref, w2f_ref, w1b_ref, w2b_ref, wg_ref,
                        pred_ref, sym_ref,
                        slab, slabd, xd_scr, t_scr, act_scr, back_scr):
    thr = thr_ref[0]
    f32 = jnp.float32
    bf16 = jnp.bfloat16

    def im2col(dst, col0, load_src, cin, cast_bf16):
        # Writes the 9*cin-row im2col of a 3x3 SAME conv into
        # dst[:, col0:col0+HWP].  Column-edge + pad-lane masking is folded into
        # the three column bases, so the row shifts (multiples of W) need no
        # further masks; the output's pad lanes become garbage and are masked
        # again on the *next* conv's input (or sliced away in the wrapper).
        for dx in range(3):
            base = load_src()                           # [cin, HWP] f32
            cshift = 1 - dx                             # +1: left tap, -1: right tap
            if cshift:
                base = _lane_roll(base, cshift)
            base = base * m_ref[dx:dx + 1, :]           # edge + validity mask
            for dy in range(3):
                rshift = (1 - dy) * W                   # +W: up tap, -W: down tap
                tap = _lane_roll(base, rshift) if rshift else base
                if cast_bf16:
                    tap = tap.astype(bf16)
                dst[pl.ds((dy * 3 + dx) * cin, cin), pl.ds(col0, HWP)] = tap

    def narrow_slab():
        return slab[:, :HWP]                            # [K9, HWP] bf16

    # ---- conv_D : 1 -> 32 channels ------------------------------------------
    slabd[pl.ds(9, 7), :] = jnp.zeros((7, HWP), f32)    # zero the K-pad rows once
    im2col(slabd, 0, lambda: x_ref[0], 1, cast_bf16=False)
    acc = jnp.dot(wd_ref[...], slabd[...].astype(bf16),
                  preferred_element_type=f32)
    xd_scr[...] = acc.astype(bf16)                      # x_D

    # ---- conv1_forward + relu -------------------------------------------------
    im2col(slab, 0, lambda: xd_scr[...].astype(f32), C, cast_bf16=True)
    acc = jnp.dot(w1f_ref[...], narrow_slab(), preferred_element_type=f32)
    t_scr[:, pl.ds(0, HWP)] = jnp.maximum(acc, 0.0).astype(bf16)

    # ---- conv2_forward -> x_forward, soft threshold ----------------------------
    im2col(slab, 0, lambda: t_scr[:, :HWP].astype(f32), C, cast_bf16=True)
    acc = jnp.dot(w2f_ref[...], narrow_slab(), preferred_element_type=f32)
    act_scr[:, pl.ds(HWP, HWP)] = acc.astype(bf16)                       # x_forward
    act_scr[:, pl.ds(0, HWP)] = (jnp.sign(acc) *
                                 jnp.maximum(jnp.abs(acc) - thr,
                                             0.0)).astype(bf16)          # x_soft

    # ---- conv1_backward (shared weights) on [x_soft | x_forward], relu ---------
    im2col(slab, 0, lambda: act_scr[:, :HWP].astype(f32), C, cast_bf16=True)
    im2col(slab, HWP, lambda: act_scr[:, pl.ds(HWP, HWP)].astype(f32), C,
           cast_bf16=True)
    acc = jnp.dot(w1b_ref[...], slab[...], preferred_element_type=f32)   # N = 2304
    t_scr[...] = jnp.maximum(acc, 0.0).astype(bf16)

    # ---- conv2_backward (shared weights), wide ----------------------------------
    im2col(slab, 0, lambda: t_scr[:, :HWP].astype(f32), C, cast_bf16=True)
    im2col(slab, HWP, lambda: t_scr[:, pl.ds(HWP, HWP)].astype(f32), C,
           cast_bf16=True)
    acc = jnp.dot(w2b_ref[...], slab[...], preferred_element_type=f32)   # N = 2304
    back_scr[...] = acc[:, :HWP].astype(bf16)                            # x_backward
    sym_ref[0] = acc[:, HWP:] - xd_scr[...].astype(f32)                  # x_D_est - x_D

    # ---- conv_G : 32 -> 1 + residual --------------------------------------------
    im2col(slab, 0, lambda: back_scr[...].astype(f32), C, cast_bf16=True)
    acc = jnp.dot(wg_ref[...], narrow_slab(), preferred_element_type=f32)
    pred_ref[0] = x_ref[0] + acc[0:1, :]                                 # x_pred (flat)


# ---------------------------------------------------------------------------
# One-time prepacking (hoisted out of the per-call forward path).
# ---------------------------------------------------------------------------
def _w_mat(w_oihw):
    """OIHW [Cout, Cin, 3, 3] -> bf16 GEMM matrix [Cout, 9*Cin] (tap-major)."""
    co, ci = w_oihw.shape[:2]
    return (jnp.transpose(w_oihw, (0, 2, 3, 1))
            .reshape(co, 9 * ci).astype(jnp.bfloat16))


def _col_masks():
    p = jnp.arange(HWP, dtype=jnp.int32)
    col = p % W
    valid = p < HW
    return jnp.stack([
        (col != 0) & valid,          # left-tap validity   (dx = 0)
        valid,                       # pad-lane validity   (dx = 1)
        (col != W - 1) & valid,      # right-tap validity  (dx = 2)
    ]).astype(jnp.float32)           # [3, HWP]


def prepare_block(params, PhiTPhi):
    """One-time repack of PhiTPhi and the conv weights (call once per model)."""
    _calibrate_roll_sign()           # must happen eagerly, before kernel tracing
    pad = HWP - HW
    return {
        "phi": jnp.pad(PhiTPhi, ((0, pad), (0, pad))).astype(jnp.bfloat16),
        "masks": _col_masks(),
        "w_d": jnp.pad(_w_mat(params["conv_D"]), ((0, 0), (0, 7))),   # [32, 16]
        "w1f": _w_mat(params["conv1_forward"]),                       # [32, 288]
        "w2f": _w_mat(params["conv2_forward"]),
        "w1b": _w_mat(params["conv1_backward"]),
        "w2b": _w_mat(params["conv2_backward"]),
        "w_g": jnp.pad(_w_mat(params["conv_G"]), ((0, 7), (0, 0))),   # [8, 288]
        "lambda_step": params["lambda_step"],
        "soft_thr": params["soft_thr"],
    }


# ---------------------------------------------------------------------------
# BasicBlock forward
# ---------------------------------------------------------------------------
def basic_block_apply(x, PhiTb, prep):
    b = x.shape[0]
    pad = HWP - HW

    # ---- proximal gradient step (lane-padded, bf16 PhiTPhi stream) ----------
    x_pad = jnp.pad(x, ((0, 0), (0, pad)))
    phitb_pad = jnp.pad(PhiTb, ((0, 0), (0, pad)))
    x_step = _grad_step(x_pad, prep["phi"], phitb_pad, prep["lambda_step"])

    # ---- fused conv chain (one kernel, one grid step per image) -------------
    pred_pad, sym_pad = pl.pallas_call(
        _fused_block_kernel,
        grid=(b,),
        out_shape=(jax.ShapeDtypeStruct((b, 1, HWP), jnp.float32),
                   jax.ShapeDtypeStruct((b, C, HWP), jnp.float32)),
        in_specs=[
            pl.BlockSpec(memory_space=pltpu.MemorySpace.SMEM),       # soft_thr
            pl.BlockSpec((1, 1, HWP), lambda i: (i, 0, 0)),          # x_step (per image)
            pl.BlockSpec((3, HWP), lambda i: (0, 0)),                # column masks
            pl.BlockSpec((C, 16), lambda i: (0, 0)),                 # conv_D
            pl.BlockSpec((C, K9), lambda i: (0, 0)),                 # conv1_forward
            pl.BlockSpec((C, K9), lambda i: (0, 0)),                 # conv2_forward
            pl.BlockSpec((C, K9), lambda i: (0, 0)),                 # conv1_backward
            pl.BlockSpec((C, K9), lambda i: (0, 0)),                 # conv2_backward
            pl.BlockSpec((8, K9), lambda i: (0, 0)),                 # conv_G
        ],
        out_specs=(
            pl.BlockSpec((1, 1, HWP), lambda i: (i, 0, 0)),          # x_pred (flat)
            pl.BlockSpec((1, C, HWP), lambda i: (i, 0, 0)),          # symloss (NCHW-flat)
        ),
        scratch_shapes=[
            pltpu.VMEM((K9, HWP2), jnp.bfloat16),    # shared im2col slab (wide)
            pltpu.VMEM((16, HWP), jnp.float32),      # conv_D mini im2col slab
            pltpu.VMEM((C, HWP), jnp.bfloat16),      # x_D
            pltpu.VMEM((C, HWP2), jnp.bfloat16),     # relu temp (narrow & wide)
            pltpu.VMEM((C, HWP2), jnp.bfloat16),     # [x_soft | x_forward]
            pltpu.VMEM((C, HWP), jnp.bfloat16),      # x_backward
        ],
        compiler_params=pltpu.CompilerParams(
            dimension_semantics=("parallel",)),
    )(prep["soft_thr"], x_step.reshape(b, 1, HWP), prep["masks"],
      prep["w_d"], prep["w1f"], prep["w2f"], prep["w1b"], prep["w2b"],
      prep["w_g"])

    x_pred = pred_pad.reshape(b, HWP)[:, :HW]
    symloss = sym_pad[:, :, :HW].reshape(b, C, H, W)     # already channel-major
    return x_pred, symloss


def basic_block_forward(x, PhiTPhi, PhiTb, params):
    """Torch-signature convenience wrapper (re-packs weights every call)."""
    return basic_block_apply(x, PhiTb, prepare_block(params, PhiTPhi))


# ---------------------------------------------------------------------------
# Parameters (deterministic synthetic init matching the torch __init__ shapes)
# ---------------------------------------------------------------------------
def _xavier_normal(key, shape):
    cout, cin, kh, kw = shape
    fan_in, fan_out = cin * kh * kw, cout * kh * kw
    std = (2.0 / (fan_in + fan_out)) ** 0.5
    return std * jax.random.normal(key, shape, jnp.float32)


def init_params(key):
    ks = jax.random.split(key, 6)
    return {
        "lambda_step": jnp.array([0.5], jnp.float32),
        "soft_thr": jnp.array([0.01], jnp.float32),
        "conv_D": _xavier_normal(ks[0], (32, 1, 3, 3)),
        "conv1_forward": _xavier_normal(ks[1], (32, 32, 3, 3)),
        "conv2_forward": _xavier_normal(ks[2], (32, 32, 3, 3)),
        "conv1_backward": _xavier_normal(ks[3], (32, 32, 3, 3)),
        "conv2_backward": _xavier_normal(ks[4], (32, 32, 3, 3)),
        "conv_G": _xavier_normal(ks[5], (1, 32, 3, 3)),
    }


# ---------------------------------------------------------------------------
# Pure-JAX f32 reference (for a loose bf16-tolerance self-check)
# ---------------------------------------------------------------------------
def _reference_forward(x, PhiTPhi, PhiTb, params):
    lam = params["lambda_step"][0]
    thr = params["soft_thr"][0]
    hp = jax.lax.Precision.HIGHEST

    def conv(t, w):
        return jax.lax.conv_general_dilated(
            t, w, (1, 1), "SAME",
            dimension_numbers=("NCHW", "OIHW", "NCHW"), precision=hp)

    x = x - lam * jnp.dot(x, PhiTPhi, precision=hp) + lam * PhiTb
    x_in = x.reshape(-1, 1, H, W)
    x_d = conv(x_in, params["conv_D"])
    t = jax.nn.relu(conv(x_d, params["conv1_forward"]))
    x_fwd = conv(t, params["conv2_forward"])
    x_soft = jnp.sign(x_fwd) * jax.nn.relu(jnp.abs(x_fwd) - thr)
    t = jax.nn.relu(conv(x_soft, params["conv1_backward"]))
    x_back = conv(t, params["conv2_backward"])
    x_pred = (x_in + conv(x_back, params["conv_G"])).reshape(-1, HW)
    t = jax.nn.relu(conv(x_fwd, params["conv1_backward"]))
    symloss = conv(t, params["conv2_backward"]) - x_d
    return x_pred, symloss


# ---------------------------------------------------------------------------
if __name__ == "__main__":
    key = jax.random.PRNGKey(0)
    k_x, k_phi, k_b, k_p = jax.random.split(key, 4)

    B = 2
    x = jax.random.normal(k_x, (B, HW), jnp.float32)
    Phi = jax.random.normal(k_phi, (272, HW), jnp.float32) / 33.0   # CS sampling matrix
    PhiTPhi = Phi.T @ Phi                                           # [1089, 1089]
    PhiTb = jax.random.normal(k_b, (B, HW), jnp.float32)
    params = init_params(k_p)

    _calibrate_roll_sign()          # tiny probe kernel; must run outside jit

    # One-time prepacking (hoisted out of the per-call forward path), then the
    # hot path only takes (x, PhiTb).
    prep = prepare_block(params, PhiTPhi)
    fwd = jax.jit(basic_block_apply)

    x_pred, symloss = fwd(x, PhiTb, prep)
    jax.block_until_ready((x_pred, symloss))

    assert x_pred.shape == (B, HW)
    assert symloss.shape == (B, 32, H, W)

    # Correctness vs. f32 reference (bf16 MXU operands => loose tolerance).
    ref_pred, ref_sym = jax.jit(_reference_forward)(x, PhiTPhi, PhiTb, params)

    def _nerr(a, r):
        return float(jnp.max(jnp.abs(a - r)) / (jnp.max(jnp.abs(r)) + 1e-6))

    assert _nerr(x_pred, ref_pred) < 0.08, ("x_pred mismatch", _nerr(x_pred, ref_pred))
    assert _nerr(symloss, ref_sym) < 0.08, ("symloss mismatch", _nerr(symloss, ref_sym))

    print("KERNEL_OK")
</pallas_src>

<mosaic_0001>
module attributes {stable_mosaic.version = 11 : i64} {
  func.func @probe(%arg0: memref<8x128xf32, #tpu.memory_space<vmem>>, %arg1: memref<8x128xf32, #tpu.memory_space<vmem>>) attributes {dimension_semantics = [], scalar_prefetch = 0 : i64, scratch_operands = 0 : i64, tpu.core_type = #tpu.core_type<tc>} {
    %c0 = arith.constant 0 : index
    %c0_0 = arith.constant 0 : index
    %0 = vector.load %arg0[%c0, %c0_0] : memref<8x128xf32, #tpu.memory_space<vmem>>, vector<8x128xf32>
    %c1_i32 = arith.constant 1 : i32
    %1 = tpu.dynamic_rotate %0 by %c1_i32 dim 1 : vector<8x128xf32>, i32 -> vector<8x128xf32>
    %c0_1 = arith.constant 0 : index
    %c0_2 = arith.constant 0 : index
    %2 = vector.load %arg1[%c0_1, %c0_2] : memref<8x128xf32, #tpu.memory_space<vmem>>, vector<8x128xf32>
    tpu.vector_store %arg1[%c0_1, %c0_2], %1 {strides = array<i32>} : memref<8x128xf32, #tpu.memory_space<vmem>>, vector<8x128xf32>,
    return
  }
}

</mosaic_0001>

<llo_original>
// kernel: tpu_custom_call.1
$region0: #{tpu_custom_call.1}
  #allocation0 [shape = 'u32[]', space=smem, size = 0x4, offset = 0x4, fixed_abs, tag = 'smem constant byte address 0x4 - core index']
  #allocation1 [shape = 'u32[72,128]{1,0:T(1,128)}', space=vmem, size = 0x9000, scoped, tag = 'internal scratch']
  %s0 = inlined_call_operand.hbm [shape: f32[8,128], index: 0, kind: input, shape index: {}]
  %s1 = inlined_call_operand.hbm [shape: f32[8,128], index: 1, kind: output, shape index: {}]
  %s2 = sld [smem:[#allocation0]]
  $region18: #{tpu_custom_call.1} parent=0
    _
  %s4 = ssub.s32 1, %s2
  %s5 = scalar_select 0, %s4, %s2
  $region1: #{tpu_custom_call.1} parent=0
    #allocation2 [shape = 'u8[4096]{0}', space=vmem, size = 0x1000, scoped, tag = 'input window, operand 0, single buffered']
    #allocation3 [shape = 's32[1]{0}', space=sflag, size = 0x4, scoped, tag = 'scoped memory for tpu_custom_call.1']
    #allocation4 [shape = 's32[1]{0}', space=sflag, size = 0x4, scoped, tag = 'scoped memory for tpu_custom_call.1']
    #allocation5 [shape = 'u8[4096]{0}', space=vmem, size = 0x1000, scoped, tag = 'output window, operand 0, single buffered']
    %6 = vsyncpa [#allocation3], 0
    %7 = vsyncpa [#allocation4], 0
    // Predicated region
    $region2: #{tpu_custom_call.1} parent=1 // pred_check
      _
    $region3: #{tpu_custom_call.1} parent=1 // pred_check_branch
      %9 = sbr.rel (0) target = $region5
    $region4: #{tpu_custom_call.1} parent=1 // pred_region
      %11 = vsyncadd [#allocation3], 0
      %s13 = sshll.u32 %s0, 4
      %s14 = int_to_ptr.hbm [resolvable:$true] %s13
      %s15 = sshll.u32 [#allocation2], 4
      %s16 = int_to_ptr.vmem [resolvable:$true] %s15
      %18 = dma.hbm_to_vmem [thread:$0]  %s14, 128, %s16, [#allocation3]
    $region5: #{tpu_custom_call.1} parent=1 // pred_fallthru
      _
    // Predicated region
    $region6: #{tpu_custom_call.1} parent=1 // pred_check
      _
    $region7: #{tpu_custom_call.1} parent=1 // pred_check_branch
      %20 = sbr.rel (0) target = $region9
    $region8: #{tpu_custom_call.1} parent=1 // pred_region
      %22 = dma.done [#allocation3], 128
    $region9: #{tpu_custom_call.1} parent=1 // pred_fallthru
      _
    %v23 = vld [vmem:[#allocation2] sm:$0xff]
    %24 = vrot.lane.b32.xlu0 %v23, 1
    %v25 = vpop.permute.xlu0 %24
    %26 = vst [vmem:[#allocation5] sm:$0xff] %v25
    // Predicated region
    $region10: #{tpu_custom_call.1} parent=1 // pred_check
      _
    $region11: #{tpu_custom_call.1} parent=1 // pred_check_branch
      %28 = sbr.rel (0) target = $region13
    $region12: #{tpu_custom_call.1} parent=1 // pred_region
      %30 = vsyncadd [#allocation4], 0
      %s32 = sshll.u32 [#allocation5], 4
      %s33 = int_to_ptr.vmem [resolvable:$true] %s32
      %s34 = sshll.u32 %s1, 4
      %s35 = int_to_ptr.hbm [resolvable:$true] %s34
      %37 = dma.vmem_to_hbm [thread:$0]  %s33, 128, %s35, [#allocation4]
    $region13: #{tpu_custom_call.1} parent=1 // pred_fallthru
      _
    // Predicated region
    $region14: #{tpu_custom_call.1} parent=1 // pred_check
      _
    $region15: #{tpu_custom_call.1} parent=1 // pred_check_branch
      %39 = sbr.rel (0) target = $region17
    $region16: #{tpu_custom_call.1} parent=1 // pred_region
      %41 = dma.done [#allocation4], 128
    $region17: #{tpu_custom_call.1} parent=1 // pred_fallthru
      _
    %42 = vsyncpa [#allocation3], 1
    %43 = vsyncpa [#allocation4], 1

</llo_original>
